<compile_context>
chip_gen: v7x
topology: tpu7x:2x2x1
jax: 0.10.0
libtpu: 0.0.40
codegen_flags: <defaults>
</compile_context>

<pallas_src>
import functools

import numpy as np
import jax
import jax.numpy as jnp
from jax.experimental import pallas as pl
from jax.experimental.pallas import tpu as pltpu


@functools.lru_cache(maxsize=None)
def _pltpu_roll_matches_jnp_roll() -> bool:
    """One-time probe of pltpu.roll's rotation direction (vs jnp.roll)."""
    def k(x_ref, o_ref):
        o_ref[...] = pltpu.roll(x_ref[...], shift=1, axis=1)

    x = jnp.arange(8 * 128, dtype=jnp.float32).reshape(8, 128)
    out = pl.pallas_call(k, out_shape=jax.ShapeDtypeStruct((8, 128), jnp.float32))(x)
    return bool(jnp.array_equal(out, jnp.roll(x, 1, axis=1)))


@functools.lru_cache(maxsize=None)
def _is_v5e() -> bool:
    """v5e has no native bf16 VPU elementwise support -> cast late there."""
    try:
        kind = jax.devices()[0].device_kind.lower()
    except Exception:
        return False
    return ("v5 lite" in kind) or ("v5lite" in kind) or ("v5e" in kind)


def _pick_nb(n: int, cap: int = 8) -> int:
    """Samples per grid step: amortize per-step overhead, keep >= 2 steps."""
    best = 1
    for nb in range(1, min(cap, max(1, n // 2)) + 1):
        if n % nb == 0:
            best = nb
    return best


@functools.lru_cache(maxsize=None)
def _make_cond_double_conv(N, NB, Cin, Cmid, Cout, Zc, H, W,
                           roll_like_jnp, taps_in_bf16, eps):
    """Builds the fused CondDoubleConv pallas_call for static shapes."""
    HW = H * W
    zrows = 2 * (Cmid + Cout)
    tap_dtype = jnp.bfloat16 if taps_in_bf16 else jnp.float32
    OFFSETS = [(dy, dx) for dy in (-1, 0, 1) for dx in (-1, 0, 1)]

    def kernel(x_ref, ss_ref, w1_ref, b1_ref, w2_ref, b2_ref, o_ref):
        # --- zero-padding masks, hoisted: shared by both convs, all samples.
        pos = jax.lax.broadcasted_iota(jnp.int32, (1, HW), 1)
        hh = pos // W
        ww = pos % W
        masks = []
        for dy, dx in OFFSETS:
            if dy == 0 and dx == 0:
                masks.append(None)
            else:
                masks.append((hh + dy >= 0) & (hh + dy < H) &
                             (ww + dx >= 0) & (ww + dx < W))

        def im2col(src):
            """(C, HW) -> (9*C, HW): rolled, zero-padded taps, tap-major rows."""
            taps = []
            for t, (dy, dx) in enumerate(OFFSETS):
                s = dy * W + dx                 # flattened spatial offset
                if s == 0:
                    taps.append(src)
                else:
                    shift = (-s if roll_like_jnp else s) % HW
                    rolled = pltpu.roll(src, shift=shift, axis=1)       # XLU
                    taps.append(jnp.where(masks[t], rolled,
                                          jnp.array(0, rolled.dtype)))  # pad
            return jnp.concatenate(taps, axis=0)

        def conv3x3(src, w_ref, b_ref):
            """One MXU matmul per conv: (Cout, 9*Cin) @ (9*Cin, HW)."""
            stack = im2col(src).astype(jnp.bfloat16)   # no-op if already bf16
            y = jnp.dot(w_ref[...], stack, preferred_element_type=jnp.float32)
            return y + b_ref[...]                      # conv bias (f32)

        def cond_inorm_relu(y, scale, shift):
            """torch .var() is unbiased (HW-1); then *scale + shift; ReLU."""
            mean = jnp.mean(y, axis=1, keepdims=True)
            d = y - mean
            var = jnp.sum(d * d, axis=1, keepdims=True) * (1.0 / (HW - 1))
            yn = d * jax.lax.rsqrt(var + eps)
            return jnp.maximum(yn * scale + shift, 0.0)

        for i in range(NB):                            # static unroll
            ss = ss_ref[i]                             # (zrows, 1) f32 column
            scale1, shift1 = ss[0:Cmid], ss[Cmid:2 * Cmid]
            scale2 = ss[2 * Cmid:2 * Cmid + Cout]
            shift2 = ss[2 * Cmid + Cout:zrows]

            y = conv3x3(x_ref[i].astype(tap_dtype), w1_ref, b1_ref)   # conv1
            y = cond_inorm_relu(y, scale1, shift1)                    # norm1+relu
            y = conv3x3(y.astype(tap_dtype), w2_ref, b2_ref)          # conv2
            y = cond_inorm_relu(y, scale2, shift2)                    # norm2+relu
            o_ref[i] = y

    call = pl.pallas_call(
        kernel,
        grid=(N // NB,),
        in_specs=[
            pl.BlockSpec((NB, Cin, HW), lambda g: (g, 0, 0)),       # x
            pl.BlockSpec((NB, zrows, 1), lambda g: (g, 0, 0)),      # scale/shift
            pl.BlockSpec((Cmid, 9 * Cin), lambda g: (0, 0)),        # w1 (bf16)
            pl.BlockSpec((Cmid, 1), lambda g: (0, 0)),              # b1
            pl.BlockSpec((Cout, 9 * Cmid), lambda g: (0, 0)),       # w2 (bf16)
            pl.BlockSpec((Cout, 1), lambda g: (0, 0)),              # b2
        ],
        out_specs=pl.BlockSpec((NB, Cout, HW), lambda g: (g, 0, 0)),
        out_shape=jax.ShapeDtypeStruct((N, Cout, HW), jnp.float32),
        compiler_params=pltpu.CompilerParams(
            dimension_semantics=("parallel",),     # batch across TCs (v7x)
            vmem_limit_bytes=32 * 1024 * 1024),    # safe on v5e/v6e/v7x
    )
    return jax.jit(call)


def cond_double_conv(params, x, z, eps=1e-5):
    """CondDoubleConv forward.  x: (N, Cin, H, W) NCHW; z: (N, Zc, 1, 1)."""
    N, Cin, H, W = x.shape
    Zc = z.shape[1]
    Cmid, Cout = params['w1'].shape[0], params['w2'].shape[0]
    zrows = 2 * (Cmid + Cout)

    # Conditioning path: all four ReLU(Conv1x1(z)) scale/shift heads as one
    # batched XLA matmul outside the kernel (no N=1 matmul on the MXU).
    zf = z.reshape(N, Zc).astype(jnp.float32)
    ss = jnp.maximum(zf @ params['zw'].T + params['zb'].reshape(1, zrows), 0.0)
    ss = ss.reshape(N, zrows, 1)

    nb = _pick_nb(N)
    call = _make_cond_double_conv(N, nb, Cin, Cmid, Cout, Zc, H, W,
                                  _pltpu_roll_matches_jnp_roll(),
                                  not _is_v5e(), float(eps))
    out = call(
        x.reshape(N, Cin, H * W).astype(jnp.float32),
        ss,
        params['w1'].astype(jnp.bfloat16), params['b1'],
        params['w2'].astype(jnp.bfloat16), params['b2'])
    return out.reshape(N, Cout, H, W)


def init_cond_double_conv(key, in_channels, out_channels, z_channels,
                          mid_channels=None):
    """Deterministic parameters.

    3x3 conv weights are stored lane-dense as (Cout, 9*Cin) with column index
    t*Cin + ci, tap t = ky*3 + kx (ky,kx in {0,1,2}); column [co, t*Cin+ci]
    corresponds to torch weight[co, ci, ky, kx].  The conditioning path packs
    the four 1x1-conv weights row-wise as [scale1; shift1; scale2; shift2]:
    zw (2*(Cmid+Cout), Zc), zb (..., 1).
    """
    if mid_channels is None:
        mid_channels = out_channels
    ks = jax.random.split(key, 12)

    def w3x3(k, ci, co):
        return jax.random.normal(k, (co, 9 * ci), jnp.float32) / np.sqrt(9 * ci)

    def w1x1(k, ci, co):
        return jax.random.normal(k, (co, ci), jnp.float32) / np.sqrt(ci)

    def bias(k, co):
        return 0.05 * jax.random.normal(k, (co, 1), jnp.float32)

    return dict(
        w1=w3x3(ks[0], in_channels, mid_channels), b1=bias(ks[1], mid_channels),
        w2=w3x3(ks[2], mid_channels, out_channels), b2=bias(ks[3], out_channels),
        zw=jnp.concatenate([w1x1(ks[4], z_channels, mid_channels),    # scale1
                            w1x1(ks[5], z_channels, mid_channels),    # shift1
                            w1x1(ks[6], z_channels, out_channels),    # scale2
                            w1x1(ks[7], z_channels, out_channels)],   # shift2
                           axis=0),
        zb=jnp.concatenate([bias(ks[8], mid_channels), bias(ks[9], mid_channels),
                            bias(ks[10], out_channels), bias(ks[11], out_channels)],
                           axis=0))


def reference_forward(params, x, z, eps=1e-5):
    """Pure-XLA reference with PyTorch semantics.  Conv matmul operands are
    rounded through bf16 to mirror the kernel's explicit dtype policy (stats
    and accumulation stay in f32)."""
    N, Cin, H, W = x.shape
    Zc = z.shape[1]
    Cmid, Cout = params['w1'].shape[0], params['w2'].shape[0]

    def bf16(a):
        return a.astype(jnp.bfloat16).astype(jnp.float32)

    def conv3(x, w2d, b):
        co = w2d.shape[0]
        ci = w2d.shape[1] // 9
        w = jnp.transpose(w2d.reshape(co, 3, 3, ci), (0, 3, 1, 2))   # OIHW
        y = jax.lax.conv_general_dilated(
            bf16(x), bf16(w), window_strides=(1, 1), padding=((1, 1), (1, 1)),
            dimension_numbers=('NCHW', 'OIHW', 'NCHW'))
        return y + b.reshape(1, co, 1, 1)

    def cin_relu(x, scale, shift):
        n, c, h, w = x.shape
        xr = x.reshape(n, c, h * w)
        mean = xr.mean(axis=2, keepdims=True)
        var = xr.var(axis=2, ddof=1, keepdims=True)         # torch unbiased var
        xn = ((xr - mean) * jax.lax.rsqrt(var + eps)).reshape(n, c, h, w)
        return jnp.maximum(xn * scale[:, :, None, None] + shift[:, :, None, None], 0.0)

    zf = z.reshape(N, Zc).astype(jnp.float32)
    ss = jnp.maximum(zf @ params['zw'].T + params['zb'].reshape(1, -1), 0.0)
    scale1, shift1 = ss[:, 0:Cmid], ss[:, Cmid:2 * Cmid]
    scale2, shift2 = ss[:, 2 * Cmid:2 * Cmid + Cout], ss[:, 2 * Cmid + Cout:]

    y = conv3(x.astype(jnp.float32), params['w1'], params['b1'])
    y = cin_relu(y, scale1, shift1)
    y = conv3(y, params['w2'], params['b2'])
    y = cin_relu(y, scale2, shift2)
    return y


if __name__ == "__main__":
    N, IN_CH, OUT_CH, Z_CH, S = 2, 4, 32, 8, 16     # mid_channels defaults to OUT_CH

    key = jax.random.PRNGKey(0)
    kx, kz, kp = jax.random.split(key, 3)
    x = jax.random.normal(kx, (N, IN_CH, S, S), jnp.float32)    # NCHW like PyTorch
    z = jax.random.normal(kz, (N, Z_CH, 1, 1), jnp.float32)     # conditioning code

    params = init_cond_double_conv(kp, IN_CH, OUT_CH, Z_CH)

    out = cond_double_conv(params, x, z)
    out = jax.block_until_ready(out)

    assert out.shape == (N, OUT_CH, S, S), out.shape
    assert bool(jnp.all(jnp.isfinite(out)))

    ref = reference_forward(params, x, z)
    np.testing.assert_allclose(np.asarray(out), np.asarray(ref), rtol=3e-2, atol=3e-2)

    print("KERNEL_OK")
</pallas_src>

<mosaic_0001>
module attributes {stable_mosaic.version = 11 : i64} {
  func.func @k(%arg0: memref<8x128xf32, #tpu.memory_space<vmem>>, %arg1: memref<8x128xf32, #tpu.memory_space<vmem>>) attributes {dimension_semantics = [], scalar_prefetch = 0 : i64, scratch_operands = 0 : i64, tpu.core_type = #tpu.core_type<tc>} {
    %c0 = arith.constant 0 : index
    %c0_0 = arith.constant 0 : index
    %0 = vector.load %arg0[%c0, %c0_0] : memref<8x128xf32, #tpu.memory_space<vmem>>, vector<8x128xf32>
    %c1_i32 = arith.constant 1 : i32
    %1 = tpu.dynamic_rotate %0 by %c1_i32 dim 1 : vector<8x128xf32>, i32 -> vector<8x128xf32>
    %c0_1 = arith.constant 0 : index
    %c0_2 = arith.constant 0 : index
    %2 = vector.load %arg1[%c0_1, %c0_2] : memref<8x128xf32, #tpu.memory_space<vmem>>, vector<8x128xf32>
    tpu.vector_store %arg1[%c0_1, %c0_2], %1 {strides = array<i32>} : memref<8x128xf32, #tpu.memory_space<vmem>>, vector<8x128xf32>,
    return
  }
}

</mosaic_0001>

<llo_original>
// kernel: tpu_custom_call.1
$region0: #{tpu_custom_call.1}
  #allocation0 [shape = 'u32[]', space=smem, size = 0x4, offset = 0x4, fixed_abs, tag = 'smem constant byte address 0x4 - core index']
  #allocation1 [shape = 'u32[144,128]{1,0:T(1,128)}', space=vmem, size = 0x12000, scoped, tag = 'internal scratch']
  %s0 = inlined_call_operand.hbm [shape: f32[8,128], index: 0, kind: input, shape index: {}]
  %s1 = inlined_call_operand.hbm [shape: f32[8,128], index: 1, kind: output, shape index: {}]
  %s2 = sld [smem:[#allocation0]]
  $region18: #{tpu_custom_call.1} parent=0
    _
  %s4 = ssub.s32 1, %s2
  %s5 = scalar_select 0, %s4, %s2
  $region1: #{tpu_custom_call.1} parent=0
    #allocation2 [shape = 'u8[4096]{0}', space=vmem, size = 0x1000, scoped, tag = 'input window, operand 0, single buffered']
    #allocation3 [shape = 's32[1]{0}', space=sflag, size = 0x4, scoped, tag = 'scoped memory for tpu_custom_call.1']
    #allocation4 [shape = 's32[1]{0}', space=sflag, size = 0x4, scoped, tag = 'scoped memory for tpu_custom_call.1']
    #allocation5 [shape = 'u8[4096]{0}', space=vmem, size = 0x1000, scoped, tag = 'output window, operand 0, single buffered']
    %6 = vsyncpa [#allocation3], 0
    %7 = vsyncpa [#allocation4], 0
    // Predicated region
    $region2: #{tpu_custom_call.1} parent=1 // pred_check
      _
    $region3: #{tpu_custom_call.1} parent=1 // pred_check_branch
      %9 = sbr.rel (0) target = $region5
    $region4: #{tpu_custom_call.1} parent=1 // pred_region
      %s11 = ssub.s32 128, 128
      %12 = vsyncadd [#allocation3], %s11
      %s14 = sshll.u32 [#allocation2], 4
      %s15 = int_to_ptr.vmem [resolvable:$true] %s14
      %17 = dma.hbm_to_vmem [thread:$0]  %s0, 128, %s15, [#allocation3]
    $region5: #{tpu_custom_call.1} parent=1 // pred_fallthru
      _
    // Predicated region
    $region6: #{tpu_custom_call.1} parent=1 // pred_check
      _
    $region7: #{tpu_custom_call.1} parent=1 // pred_check_branch
      %19 = sbr.rel (0) target = $region9
    $region8: #{tpu_custom_call.1} parent=1 // pred_region
      %20 = dma.done [#allocation3], 128
    $region9: #{tpu_custom_call.1} parent=1 // pred_fallthru
      _
    %v21 = vld [vmem:[#allocation2] sm:$0xff]
    %22 = vrot.lane.b32.xlu0 %v21, 1
    %v23 = vpop.permute.xlu0 %22
    %24 = vst [vmem:[#allocation5] sm:$0xff] %v23
    // Predicated region
    $region10: #{tpu_custom_call.1} parent=1 // pred_check
      _
    $region11: #{tpu_custom_call.1} parent=1 // pred_check_branch
      %26 = sbr.rel (0) target = $region13
    $region12: #{tpu_custom_call.1} parent=1 // pred_region
      %s28 = ssub.s32 128, 128
      %29 = vsyncadd [#allocation4], %s28
      %s31 = sshll.u32 [#allocation5], 4
      %s32 = int_to_ptr.vmem [resolvable:$true] %s31
      %34 = dma.vmem_to_hbm [thread:$0]  %s32, 128, %s1, [#allocation4]
    $region13: #{tpu_custom_call.1} parent=1 // pred_fallthru
      _
    // Predicated region
    $region14: #{tpu_custom_call.1} parent=1 // pred_check
      _
    $region15: #{tpu_custom_call.1} parent=1 // pred_check_branch
      %36 = sbr.rel (0) target = $region17
    $region16: #{tpu_custom_call.1} parent=1 // pred_region
      %37 = dma.done [#allocation4], 128
    $region17: #{tpu_custom_call.1} parent=1 // pred_fallthru
      _
    %38 = vsyncpa [#allocation3], 1
    %39 = vsyncpa [#allocation4], 1

</llo_original>
